<compile_context>
chip_gen: v6e
topology: v6e:2x2x1
jax: 0.10.0
libtpu: 0.0.40
codegen_flags: <defaults>
</compile_context>

<pallas_src>
import jax
import jax.numpy as jnp
from jax import lax
from jax.experimental import pallas as pl
from jax.experimental.pallas import tpu as pltpu

HIDDEN = 20
N_OUT = 2
OUT_PAD = 128          # lane-dense output slab width
MAX_B_TILE = 256       # fill the MXU M dimension when batch is large


def _round_up(n, m):
    return ((n + m - 1) // m) * m


def _rnn_fc_kernel(xw_ref, whhT_ref, wfcT_ref, bfc_ref, out_ref, h_ref):
    # xw_ref:   (T, Bt, H)  f32  precomputed x_t * W_ih^T + (b_ih + b_hh), time-major
    # whhT_ref: (H, H)      bf16 W_hh^T
    # wfcT_ref: (H, 128)    f32  W_fc^T zero-padded to 128 lanes
    # bfc_ref:  (1, 128)    f32  b_fc zero-padded
    # out_ref:  (Bt, 128)   f32  lane-dense output slab
    # h_ref:    (Bt, H)     f32  VMEM scratch hidden state
    seq_len = xw_ref.shape[0]

    # Hoist weights/bias out of the recurrence (a few vregs, register-resident).
    whhT = whhT_ref[...]
    wfcT = wfcT_ref[...]
    bfc = bfc_ref[...]

    h_ref[...] = jnp.zeros_like(h_ref)

    def step(t, carry):
        xw_t = xw_ref[t]                                   # (Bt, H) leading-axis load
        rec = jnp.dot(h_ref[...].astype(jnp.bfloat16), whhT,
                      preferred_element_type=jnp.float32)  # bf16 MXU, f32 accumulate
        h_ref[...] = jnp.maximum(xw_t + rec, 0.0)          # relu recurrence
        return carry

    # Unroll the (tiny-body) serial time loop for LLO scheduling visibility.
    lax.fori_loop(0, seq_len, step, 0, unroll=min(seq_len, 8))

    out_ref[...] = (jnp.dot(h_ref[...], wfcT,
                            preferred_element_type=jnp.float32) + bfc)


def rnn_model_forward(x, params):
    """x: (B, T, 1) float32 -> (B, 2) float32."""
    B, T, I = x.shape
    assert I == 1
    x2d = x.reshape(B, T)

    w_ih, w_hh, b_ih, b_hh, w_fc, b_fc = (
        params["w_ih"], params["w_hh"], params["b_ih"],
        params["b_hh"], params["w_fc"], params["b_fc"])

    # Precompute input projection + fused bias, time-major: (T, B, H), f32.
    wih_row = w_ih.reshape(1, 1, HIDDEN)                    # W_ih^T for input_size=1
    bias = (b_ih + b_hh).reshape(1, 1, HIDDEN)
    xw = x2d.T[:, :, None] * wih_row + bias                 # (T, B, H)

    # Batch tile: sublane-aligned (multiple of 8), up to 256 to fill MXU M dim.
    b_tile = min(_round_up(B, 8), MAX_B_TILE)
    b_pad = _round_up(B, b_tile)
    if b_pad != B:
        xw = jnp.pad(xw, ((0, 0), (0, b_pad - B), (0, 0)))

    whhT = w_hh.T.astype(jnp.bfloat16)                      # (H, H) bf16 for the MXU
    wfcT = jnp.zeros((HIDDEN, OUT_PAD), jnp.float32).at[:, :N_OUT].set(w_fc.T)
    bfc = jnp.zeros((1, OUT_PAD), jnp.float32).at[:, :N_OUT].set(b_fc)

    # TODO(synk): for very long T, add a second ("arbitrary") grid axis over T
    # blocks (h kept in scratch across T-blocks) to bound VMEM on v7x (64 MiB).
    grid = (b_pad // b_tile,)
    out_padded = pl.pallas_call(
        _rnn_fc_kernel,
        out_shape=jax.ShapeDtypeStruct((b_pad, OUT_PAD), jnp.float32),
        grid=grid,
        in_specs=[
            pl.BlockSpec((T, b_tile, HIDDEN), lambda i: (0, i, 0)),   # xw
            pl.BlockSpec((HIDDEN, HIDDEN), lambda i: (0, 0)),          # whhT
            pl.BlockSpec((HIDDEN, OUT_PAD), lambda i: (0, 0)),         # wfcT
            pl.BlockSpec((1, OUT_PAD), lambda i: (0, 0)),              # bfc
        ],
        out_specs=pl.BlockSpec((b_tile, OUT_PAD), lambda i: (i, 0)),
        scratch_shapes=[pltpu.VMEM((b_tile, HIDDEN), jnp.float32)],
        compiler_params=pltpu.CompilerParams(
            dimension_semantics=("parallel",)),
    )(xw, whhT, wfcT, bfc)

    return out_padded[:B, :N_OUT]


def _ref_forward(x, params):
    """Pure-JAX f32 reference mirroring torch.nn.RNN(relu) + Linear."""
    B, T, _ = x.shape
    h = jnp.zeros((B, HIDDEN), jnp.float32)
    for t in range(T):
        xt = x[:, t, :]                                    # (B, 1)
        h = jax.nn.relu(xt @ params["w_ih"].T + params["b_ih"]
                        + h @ params["w_hh"].T + params["b_hh"])
    return h @ params["w_fc"].T + params["b_fc"]


def init_params(key):
    # PyTorch default init: U(-1/sqrt(hidden), 1/sqrt(hidden)) for all tensors.
    k = 1.0 / jnp.sqrt(jnp.float32(HIDDEN))
    ks = jax.random.split(key, 6)
    u = lambda kk, shape: jax.random.uniform(kk, shape, jnp.float32, -k, k)
    return {
        "w_ih": u(ks[0], (HIDDEN, 1)),
        "w_hh": u(ks[1], (HIDDEN, HIDDEN)),
        "b_ih": u(ks[2], (HIDDEN,)),
        "b_hh": u(ks[3], (HIDDEN,)),
        "w_fc": u(ks[4], (N_OUT, HIDDEN)),
        "b_fc": u(ks[5], (N_OUT,)),
    }


if __name__ == "__main__":
    key = jax.random.PRNGKey(0)
    kx, kp = jax.random.split(key)

    B, T = 4, 8
    x = jax.random.normal(kx, (B, T, 1), jnp.float32)
    params = init_params(kp)

    out = rnn_model_forward(x, params)
    out = jax.block_until_ready(out)

    ref = _ref_forward(x, params)
    assert out.shape == (B, N_OUT)
    # Tolerance loosened vs. pure-f32 because the recurrent matmul runs in bf16.
    assert jnp.allclose(out, ref, atol=2e-2, rtol=2e-2), (out, ref)

    print("KERNEL_OK")
</pallas_src>

<mosaic_0001>
module attributes {stable_mosaic.version = 11 : i64} {
  func.func @_rnn_fc_kernel(%arg0: i32, %arg1: memref<8x8x20xf32, #tpu.memory_space<vmem>>, %arg2: memref<20x20xbf16, #tpu.memory_space<vmem>>, %arg3: memref<20x128xf32, #tpu.memory_space<vmem>>, %arg4: memref<1x128xf32, #tpu.memory_space<vmem>>, %arg5: memref<8x128xf32, #tpu.memory_space<vmem>>, %arg6: memref<8x20xf32, #tpu.memory_space<vmem>>) attributes {dimension_semantics = [#tpu.dimension_semantics<parallel>], iteration_bounds = array<i64: 1>, scalar_prefetch = 0 : i64, scratch_operands = 1 : i64, tpu.core_type = #tpu.core_type<tc>, window_params = [{transform_indices = @transform_0, window_bounds = array<i64: 8, 8, 20>}, {pipeline_mode = #tpu.pipeline_mode<synchronous>, transform_indices = @transform_1, window_bounds = array<i64: 20, 20>}, {pipeline_mode = #tpu.pipeline_mode<synchronous>, transform_indices = @transform_2, window_bounds = array<i64: 20, 128>}, {pipeline_mode = #tpu.pipeline_mode<synchronous>, transform_indices = @transform_3, window_bounds = array<i64: 1, 128>}, {transform_indices = @transform_4, window_bounds = array<i64: 8, 128>}]} {
    %c0 = arith.constant 0 : index
    %c0_0 = arith.constant 0 : index
    %0 = vector.load %arg2[%c0, %c0_0] : memref<20x20xbf16, #tpu.memory_space<vmem>>, vector<20x20xbf16>
    %c0_1 = arith.constant 0 : index
    %c0_2 = arith.constant 0 : index
    %1 = vector.load %arg3[%c0_1, %c0_2] : memref<20x128xf32, #tpu.memory_space<vmem>>, vector<20x128xf32>
    %c0_3 = arith.constant 0 : index
    %c0_4 = arith.constant 0 : index
    %2 = vector.load %arg4[%c0_3, %c0_4] : memref<1x128xf32, #tpu.memory_space<vmem>>, vector<1x128xf32>
    %cst = arith.constant 0.000000e+00 : f32
    %3 = vector.broadcast %cst : f32 to vector<8x20xf32>
    %c0_5 = arith.constant 0 : index
    %c0_6 = arith.constant 0 : index
    %4 = vector.load %arg6[%c0_5, %c0_6] : memref<8x20xf32, #tpu.memory_space<vmem>>, vector<8x20xf32>
    tpu.vector_store %arg6[%c0_5, %c0_6], %3 {strides = array<i32>} : memref<8x20xf32, #tpu.memory_space<vmem>>, vector<8x20xf32>,
    %c0_i32 = arith.constant 0 : i32
    %5 = arith.index_cast %c0_i32 : i32 to index
    %c0_7 = arith.constant 0 : index
    %c0_8 = arith.constant 0 : index
    %6 = vector.load %arg1[%5, %c0_7, %c0_8] : memref<8x8x20xf32, #tpu.memory_space<vmem>>, vector<1x8x20xf32>
    %7 = vector.shape_cast %6 : vector<1x8x20xf32> to vector<8x20xf32>
    %c0_9 = arith.constant 0 : index
    %c0_10 = arith.constant 0 : index
    %8 = vector.load %arg6[%c0_9, %c0_10] : memref<8x20xf32, #tpu.memory_space<vmem>>, vector<8x20xf32>
    %9 = arith.truncf %8 : vector<8x20xf32> to vector<8x20xbf16>
    %cst_11 = arith.constant dense<0.000000e+00> : vector<8x20xf32>
    %10 = tpu.matmul %9, %0, %cst_11 {dimension_numbers = #tpu.dot_dimension_numbers<[1], [0], [0], [1], [0, 0, 1, 1], [], []>} : vector<8x20xbf16>, vector<20x20xbf16>, vector<8x20xf32> -> vector<8x20xf32>
    %11 = arith.addf %7, %10 : vector<8x20xf32>
    %cst_12 = arith.constant 0.000000e+00 : f32
    %12 = vector.broadcast %cst_12 : f32 to vector<8x20xf32>
    %13 = arith.maximumf %11, %12 : vector<8x20xf32>
    %c0_13 = arith.constant 0 : index
    %c0_14 = arith.constant 0 : index
    %14 = vector.load %arg6[%c0_13, %c0_14] : memref<8x20xf32, #tpu.memory_space<vmem>>, vector<8x20xf32>
    tpu.vector_store %arg6[%c0_13, %c0_14], %13 {strides = array<i32>} : memref<8x20xf32, #tpu.memory_space<vmem>>, vector<8x20xf32>,
    %c1_i32 = arith.constant 1 : i32
    %15 = arith.index_cast %c1_i32 : i32 to index
    %c0_15 = arith.constant 0 : index
    %c0_16 = arith.constant 0 : index
    %16 = vector.load %arg1[%15, %c0_15, %c0_16] : memref<8x8x20xf32, #tpu.memory_space<vmem>>, vector<1x8x20xf32>
    %17 = vector.shape_cast %16 : vector<1x8x20xf32> to vector<8x20xf32>
    %c0_17 = arith.constant 0 : index
    %c0_18 = arith.constant 0 : index
    %18 = vector.load %arg6[%c0_17, %c0_18] : memref<8x20xf32, #tpu.memory_space<vmem>>, vector<8x20xf32>
    %19 = arith.truncf %18 : vector<8x20xf32> to vector<8x20xbf16>
    %cst_19 = arith.constant dense<0.000000e+00> : vector<8x20xf32>
    %20 = tpu.matmul %19, %0, %cst_19 {dimension_numbers = #tpu.dot_dimension_numbers<[1], [0], [0], [1], [0, 0, 1, 1], [], []>} : vector<8x20xbf16>, vector<20x20xbf16>, vector<8x20xf32> -> vector<8x20xf32>
    %21 = arith.addf %17, %20 : vector<8x20xf32>
    %cst_20 = arith.constant 0.000000e+00 : f32
    %22 = vector.broadcast %cst_20 : f32 to vector<8x20xf32>
    %23 = arith.maximumf %21, %22 : vector<8x20xf32>
    %c0_21 = arith.constant 0 : index
    %c0_22 = arith.constant 0 : index
    %24 = vector.load %arg6[%c0_21, %c0_22] : memref<8x20xf32, #tpu.memory_space<vmem>>, vector<8x20xf32>
    tpu.vector_store %arg6[%c0_21, %c0_22], %23 {strides = array<i32>} : memref<8x20xf32, #tpu.memory_space<vmem>>, vector<8x20xf32>,
    %c2_i32 = arith.constant 2 : i32
    %25 = arith.index_cast %c2_i32 : i32 to index
    %c0_23 = arith.constant 0 : index
    %c0_24 = arith.constant 0 : index
    %26 = vector.load %arg1[%25, %c0_23, %c0_24] : memref<8x8x20xf32, #tpu.memory_space<vmem>>, vector<1x8x20xf32>
    %27 = vector.shape_cast %26 : vector<1x8x20xf32> to vector<8x20xf32>
    %c0_25 = arith.constant 0 : index
    %c0_26 = arith.constant 0 : index
    %28 = vector.load %arg6[%c0_25, %c0_26] : memref<8x20xf32, #tpu.memory_space<vmem>>, vector<8x20xf32>
    %29 = arith.truncf %28 : vector<8x20xf32> to vector<8x20xbf16>
    %cst_27 = arith.constant dense<0.000000e+00> : vector<8x20xf32>
    %30 = tpu.matmul %29, %0, %cst_27 {dimension_numbers = #tpu.dot_dimension_numbers<[1], [0], [0], [1], [0, 0, 1, 1], [], []>} : vector<8x20xbf16>, vector<20x20xbf16>, vector<8x20xf32> -> vector<8x20xf32>
    %31 = arith.addf %27, %30 : vector<8x20xf32>
    %cst_28 = arith.constant 0.000000e+00 : f32
    %32 = vector.broadcast %cst_28 : f32 to vector<8x20xf32>
    %33 = arith.maximumf %31, %32 : vector<8x20xf32>
    %c0_29 = arith.constant 0 : index
    %c0_30 = arith.constant 0 : index
    %34 = vector.load %arg6[%c0_29, %c0_30] : memref<8x20xf32, #tpu.memory_space<vmem>>, vector<8x20xf32>
    tpu.vector_store %arg6[%c0_29, %c0_30], %33 {strides = array<i32>} : memref<8x20xf32, #tpu.memory_space<vmem>>, vector<8x20xf32>,
    %c3_i32 = arith.constant 3 : i32
    %35 = arith.index_cast %c3_i32 : i32 to index
    %c0_31 = arith.constant 0 : index
    %c0_32 = arith.constant 0 : index
    %36 = vector.load %arg1[%35, %c0_31, %c0_32] : memref<8x8x20xf32, #tpu.memory_space<vmem>>, vector<1x8x20xf32>
    %37 = vector.shape_cast %36 : vector<1x8x20xf32> to vector<8x20xf32>
    %c0_33 = arith.constant 0 : index
    %c0_34 = arith.constant 0 : index
    %38 = vector.load %arg6[%c0_33, %c0_34] : memref<8x20xf32, #tpu.memory_space<vmem>>, vector<8x20xf32>
    %39 = arith.truncf %38 : vector<8x20xf32> to vector<8x20xbf16>
    %cst_35 = arith.constant dense<0.000000e+00> : vector<8x20xf32>
    %40 = tpu.matmul %39, %0, %cst_35 {dimension_numbers = #tpu.dot_dimension_numbers<[1], [0], [0], [1], [0, 0, 1, 1], [], []>} : vector<8x20xbf16>, vector<20x20xbf16>, vector<8x20xf32> -> vector<8x20xf32>
    %41 = arith.addf %37, %40 : vector<8x20xf32>
    %cst_36 = arith.constant 0.000000e+00 : f32
    %42 = vector.broadcast %cst_36 : f32 to vector<8x20xf32>
    %43 = arith.maximumf %41, %42 : vector<8x20xf32>
    %c0_37 = arith.constant 0 : index
    %c0_38 = arith.constant 0 : index
    %44 = vector.load %arg6[%c0_37, %c0_38] : memref<8x20xf32, #tpu.memory_space<vmem>>, vector<8x20xf32>
    tpu.vector_store %arg6[%c0_37, %c0_38], %43 {strides = array<i32>} : memref<8x20xf32, #tpu.memory_space<vmem>>, vector<8x20xf32>,
    %c4_i32 = arith.constant 4 : i32
    %45 = arith.index_cast %c4_i32 : i32 to index
    %c0_39 = arith.constant 0 : index
    %c0_40 = arith.constant 0 : index
    %46 = vector.load %arg1[%45, %c0_39, %c0_40] : memref<8x8x20xf32, #tpu.memory_space<vmem>>, vector<1x8x20xf32>
    %47 = vector.shape_cast %46 : vector<1x8x20xf32> to vector<8x20xf32>
    %c0_41 = arith.constant 0 : index
    %c0_42 = arith.constant 0 : index
    %48 = vector.load %arg6[%c0_41, %c0_42] : memref<8x20xf32, #tpu.memory_space<vmem>>, vector<8x20xf32>
    %49 = arith.truncf %48 : vector<8x20xf32> to vector<8x20xbf16>
    %cst_43 = arith.constant dense<0.000000e+00> : vector<8x20xf32>
    %50 = tpu.matmul %49, %0, %cst_43 {dimension_numbers = #tpu.dot_dimension_numbers<[1], [0], [0], [1], [0, 0, 1, 1], [], []>} : vector<8x20xbf16>, vector<20x20xbf16>, vector<8x20xf32> -> vector<8x20xf32>
    %51 = arith.addf %47, %50 : vector<8x20xf32>
    %cst_44 = arith.constant 0.000000e+00 : f32
    %52 = vector.broadcast %cst_44 : f32 to vector<8x20xf32>
    %53 = arith.maximumf %51, %52 : vector<8x20xf32>
    %c0_45 = arith.constant 0 : index
    %c0_46 = arith.constant 0 : index
    %54 = vector.load %arg6[%c0_45, %c0_46] : memref<8x20xf32, #tpu.memory_space<vmem>>, vector<8x20xf32>
    tpu.vector_store %arg6[%c0_45, %c0_46], %53 {strides = array<i32>} : memref<8x20xf32, #tpu.memory_space<vmem>>, vector<8x20xf32>,
    %c5_i32 = arith.constant 5 : i32
    %55 = arith.index_cast %c5_i32 : i32 to index
    %c0_47 = arith.constant 0 : index
    %c0_48 = arith.constant 0 : index
    %56 = vector.load %arg1[%55, %c0_47, %c0_48] : memref<8x8x20xf32, #tpu.memory_space<vmem>>, vector<1x8x20xf32>
    %57 = vector.shape_cast %56 : vector<1x8x20xf32> to vector<8x20xf32>
    %c0_49 = arith.constant 0 : index
    %c0_50 = arith.constant 0 : index
    %58 = vector.load %arg6[%c0_49, %c0_50] : memref<8x20xf32, #tpu.memory_space<vmem>>, vector<8x20xf32>
    %59 = arith.truncf %58 : vector<8x20xf32> to vector<8x20xbf16>
    %cst_51 = arith.constant dense<0.000000e+00> : vector<8x20xf32>
    %60 = tpu.matmul %59, %0, %cst_51 {dimension_numbers = #tpu.dot_dimension_numbers<[1], [0], [0], [1], [0, 0, 1, 1], [], []>} : vector<8x20xbf16>, vector<20x20xbf16>, vector<8x20xf32> -> vector<8x20xf32>
    %61 = arith.addf %57, %60 : vector<8x20xf32>
    %cst_52 = arith.constant 0.000000e+00 : f32
    %62 = vector.broadcast %cst_52 : f32 to vector<8x20xf32>
    %63 = arith.maximumf %61, %62 : vector<8x20xf32>
    %c0_53 = arith.constant 0 : index
    %c0_54 = arith.constant 0 : index
    %64 = vector.load %arg6[%c0_53, %c0_54] : memref<8x20xf32, #tpu.memory_space<vmem>>, vector<8x20xf32>
    tpu.vector_store %arg6[%c0_53, %c0_54], %63 {strides = array<i32>} : memref<8x20xf32, #tpu.memory_space<vmem>>, vector<8x20xf32>,
    %c6_i32 = arith.constant 6 : i32
    %65 = arith.index_cast %c6_i32 : i32 to index
    %c0_55 = arith.constant 0 : index
    %c0_56 = arith.constant 0 : index
    %66 = vector.load %arg1[%65, %c0_55, %c0_56] : memref<8x8x20xf32, #tpu.memory_space<vmem>>, vector<1x8x20xf32>
    %67 = vector.shape_cast %66 : vector<1x8x20xf32> to vector<8x20xf32>
    %c0_57 = arith.constant 0 : index
    %c0_58 = arith.constant 0 : index
    %68 = vector.load %arg6[%c0_57, %c0_58] : memref<8x20xf32, #tpu.memory_space<vmem>>, vector<8x20xf32>
    %69 = arith.truncf %68 : vector<8x20xf32> to vector<8x20xbf16>
    %cst_59 = arith.constant dense<0.000000e+00> : vector<8x20xf32>
    %70 = tpu.matmul %69, %0, %cst_59 {dimension_numbers = #tpu.dot_dimension_numbers<[1], [0], [0], [1], [0, 0, 1, 1], [], []>} : vector<8x20xbf16>, vector<20x20xbf16>, vector<8x20xf32> -> vector<8x20xf32>
    %71 = arith.addf %67, %70 : vector<8x20xf32>
    %cst_60 = arith.constant 0.000000e+00 : f32
    %72 = vector.broadcast %cst_60 : f32 to vector<8x20xf32>
    %73 = arith.maximumf %71, %72 : vector<8x20xf32>
    %c0_61 = arith.constant 0 : index
    %c0_62 = arith.constant 0 : index
    %74 = vector.load %arg6[%c0_61, %c0_62] : memref<8x20xf32, #tpu.memory_space<vmem>>, vector<8x20xf32>
    tpu.vector_store %arg6[%c0_61, %c0_62], %73 {strides = array<i32>} : memref<8x20xf32, #tpu.memory_space<vmem>>, vector<8x20xf32>,
    %c7_i32 = arith.constant 7 : i32
    %75 = arith.index_cast %c7_i32 : i32 to index
    %c0_63 = arith.constant 0 : index
    %c0_64 = arith.constant 0 : index
    %76 = vector.load %arg1[%75, %c0_63, %c0_64] : memref<8x8x20xf32, #tpu.memory_space<vmem>>, vector<1x8x20xf32>
    %77 = vector.shape_cast %76 : vector<1x8x20xf32> to vector<8x20xf32>
    %c0_65 = arith.constant 0 : index
    %c0_66 = arith.constant 0 : index
    %78 = vector.load %arg6[%c0_65, %c0_66] : memref<8x20xf32, #tpu.memory_space<vmem>>, vector<8x20xf32>
    %79 = arith.truncf %78 : vector<8x20xf32> to vector<8x20xbf16>
    %cst_67 = arith.constant dense<0.000000e+00> : vector<8x20xf32>
    %80 = tpu.matmul %79, %0, %cst_67 {dimension_numbers = #tpu.dot_dimension_numbers<[1], [0], [0], [1], [0, 0, 1, 1], [], []>} : vector<8x20xbf16>, vector<20x20xbf16>, vector<8x20xf32> -> vector<8x20xf32>
    %81 = arith.addf %77, %80 : vector<8x20xf32>
    %cst_68 = arith.constant 0.000000e+00 : f32
    %82 = vector.broadcast %cst_68 : f32 to vector<8x20xf32>
    %83 = arith.maximumf %81, %82 : vector<8x20xf32>
    %c0_69 = arith.constant 0 : index
    %c0_70 = arith.constant 0 : index
    %84 = vector.load %arg6[%c0_69, %c0_70] : memref<8x20xf32, #tpu.memory_space<vmem>>, vector<8x20xf32>
    tpu.vector_store %arg6[%c0_69, %c0_70], %83 {strides = array<i32>} : memref<8x20xf32, #tpu.memory_space<vmem>>, vector<8x20xf32>,
    %c8_i32 = arith.constant 8 : i32
    %c0_71 = arith.constant 0 : index
    %c0_72 = arith.constant 0 : index
    %85 = vector.load %arg6[%c0_71, %c0_72] : memref<8x20xf32, #tpu.memory_space<vmem>>, vector<8x20xf32>
    %cst_73 = arith.constant dense<0.000000e+00> : vector<8x128xf32>
    %86 = tpu.matmul %85, %1, %cst_73 {dimension_numbers = #tpu.dot_dimension_numbers<[1], [0], [0], [1], [0, 0, 1, 1], [], []>} : vector<8x20xf32>, vector<20x128xf32>, vector<8x128xf32> -> vector<8x128xf32>
    %87 = vector.broadcast %2 : vector<1x128xf32> to vector<8x128xf32>
    %88 = arith.addf %86, %87 : vector<8x128xf32>
    %c0_74 = arith.constant 0 : index
    %c0_75 = arith.constant 0 : index
    %89 = vector.load %arg5[%c0_74, %c0_75] : memref<8x128xf32, #tpu.memory_space<vmem>>, vector<8x128xf32>
    tpu.vector_store %arg5[%c0_74, %c0_75], %88 {strides = array<i32>} : memref<8x128xf32, #tpu.memory_space<vmem>>, vector<8x128xf32>,
    return
  }
  func.func @transform_0(%arg0: i32) -> (i32, i32, i32) {
    %c0_i32 = arith.constant 0 : i32
    %c0_i32_0 = arith.constant 0 : i32
    %c0_i32_1 = arith.constant 0 : i32
    return %c0_i32, %arg0, %c0_i32_0 : i32, i32, i32
  }
  func.func @transform_1(%arg0: i32) -> (i32, i32) {
    %c0_i32 = arith.constant 0 : i32
    %c0_i32_0 = arith.constant 0 : i32
    %c0_i32_1 = arith.constant 0 : i32
    return %c0_i32, %c0_i32_0 : i32, i32
  }
  func.func @transform_2(%arg0: i32) -> (i32, i32) {
    %c0_i32 = arith.constant 0 : i32
    %c0_i32_0 = arith.constant 0 : i32
    %c0_i32_1 = arith.constant 0 : i32
    return %c0_i32, %c0_i32_0 : i32, i32
  }
  func.func @transform_3(%arg0: i32) -> (i32, i32) {
    %c0_i32 = arith.constant 0 : i32
    %c0_i32_0 = arith.constant 0 : i32
    %c0_i32_1 = arith.constant 0 : i32
    return %c0_i32, %c0_i32_0 : i32, i32
  }
  func.func @transform_4(%arg0: i32) -> (i32, i32) {
    %c0_i32 = arith.constant 0 : i32
    %c0_i32_0 = arith.constant 0 : i32
    return %arg0, %c0_i32 : i32, i32
  }
}

</mosaic_0001>

<llo_original>
// kernel: tpu_custom_call.1
$region0: #{tpu_custom_call.1}
  #allocation0 [shape = 'u32[]', space=smem, size = 0x4, offset = 0x4, fixed_abs, tag = 'smem constant byte address 0x4 - core index']
  #allocation1 [shape = 'u32[144,128]{1,0:T(1,128)}', space=vmem, size = 0x12000, scoped, tag = 'internal scratch']
  #allocation2 [shape = 'f32[8,20]{1,0:T(8,128)}', space=vmem, size = 0x1000, scoped, tag = 'scratch operand']
  %s0 = inlined_call_operand.hbm [shape: f32[8,8,20], index: 0, kind: input, shape index: {}]
  %s1 = inlined_call_operand.hbm [shape: bf16[20,20], index: 1, kind: input, shape index: {}]
  %s2 = inlined_call_operand.hbm [shape: f32[20,128], index: 2, kind: input, shape index: {}]
  %s3 = inlined_call_operand.vmem [shape: f32[1,128], index: 3, kind: input, shape index: {}]
  %s4 = inlined_call_operand.hbm [shape: f32[8,128], index: 4, kind: output, shape index: {}]
  %s5 = sld [smem:[#allocation0]]
  $region38: #{tpu_custom_call.1} parent=0
    _
  %s7 = ssub.s32 1, %s5
  %s8 = scalar_select 0, %s7, %s5
  $region1: #{tpu_custom_call.1} parent=0
    #allocation3 [shape = 'u8[32768]{0}', space=vmem, size = 0x8000, scoped, tag = 'input window, operand 0, single buffered']
    #allocation4 [shape = 's32[1]{0}', space=sflag, size = 0x4, scoped, tag = 'scoped memory for tpu_custom_call.1']
    #allocation5 [shape = 's32[1]{0}', space=sflag, size = 0x4, scoped, tag = 'scoped memory for tpu_custom_call.1']
    #allocation6 [shape = 'u8[6144]{0}', space=vmem, size = 0x1800, scoped, tag = 'input window, operand 1, single buffered']
    #allocation7 [shape = 's32[1]{0}', space=sflag, size = 0x4, scoped, tag = 'scoped memory for tpu_custom_call.1']
    #allocation8 [shape = 'u8[12288]{0}', space=vmem, size = 0x3000, scoped, tag = 'input window, operand 2, single buffered']
    #allocation9 [shape = 'u8[4096]{0}', space=vmem, size = 0x1000, scoped, tag = 'output window, operand 0, single buffered']
    %9 = vsyncpa [#allocation4], 0
    %10 = vsyncpa [#allocation7], 0
    %11 = vsyncpa [#allocation5], 0
    // Predicated region
    $region2: #{tpu_custom_call.1} parent=1 // pred_check
      _
    $region3: #{tpu_custom_call.1} parent=1 // pred_check_branch
      %13 = sbr.rel (0) target = $region5
    $region4: #{tpu_custom_call.1} parent=1 // pred_region
      %s15 = ssub.s32 1024, 1024
      %16 = vsyncadd [#allocation4], %s15
      %s17 = sshll.u32 [#allocation3], 4
      %s18 = int_to_ptr.vmem [resolvable:$true] %s17
      %23 = dma.hbm_to_vmem [thread:$0]  %s0, 1024, %s18, [#allocation4], 128, 128, 8
    $region5: #{tpu_custom_call.1} parent=1 // pred_fallthru
      _
    // Predicated region
    $region6: #{tpu_custom_call.1} parent=1 // pred_check
      _
    $region7: #{tpu_custom_call.1} parent=1 // pred_check_branch
      %25 = sbr.rel (0) target = $region9
    $region8: #{tpu_custom_call.1} parent=1 // pred_region
      %s27 = ssub.s32 192, 192
      %28 = vsyncadd [#allocation7], %s27
      %s29 = sshll.u32 [#allocation6], 4
      %s30 = int_to_ptr.vmem [resolvable:$true] %s29
      %35 = dma.hbm_to_vmem [thread:$0]  %s1, 192, %s30, [#allocation7], 64, 64, 4
    $region9: #{tpu_custom_call.1} parent=1 // pred_fallthru
      _
    // Predicated region
    $region10: #{tpu_custom_call.1} parent=1 // pred_check
      _
    $region11: #{tpu_custom_call.1} parent=1 // pred_check_branch
      %37 = sbr.rel (0) target = $region13
    $region12: #{tpu_custom_call.1} parent=1 // pred_region
      %s39 = ssub.s32 384, 384
      %40 = vsyncadd [#allocation7], %s39
      %s41 = sshll.u32 [#allocation8], 4
      %s42 = int_to_ptr.vmem [resolvable:$true] %s41
      %47 = dma.hbm_to_vmem [thread:$0]  %s2, 384, %s42, [#allocation7], 128, 128, 8
    $region13: #{tpu_custom_call.1} parent=1 // pred_fallthru
      _
    // Predicated region
    $region14: #{tpu_custom_call.1} parent=1 // pred_check
      _
    $region15: #{tpu_custom_call.1} parent=1 // pred_check_branch
      %49 = sbr.rel (0) target = $region17
    $region16: #{tpu_custom_call.1} parent=1 // pred_region
      _
    $region17: #{tpu_custom_call.1} parent=1 // pred_fallthru
      _
    // Predicated region
    $region18: #{tpu_custom_call.1} parent=1 // pred_check
      _
    $region19: #{tpu_custom_call.1} parent=1 // pred_check_branch
      %51 = sbr.rel (0) target = $region21
    $region20: #{tpu_custom_call.1} parent=1 // pred_region
      %52 = dma.done [#allocation4], 1024
    $region21: #{tpu_custom_call.1} parent=1 // pred_fallthru
      _
    // Predicated region
    $region22: #{tpu_custom_call.1} parent=1 // pred_check
      _
    $region23: #{tpu_custom_call.1} parent=1 // pred_check_branch
      %54 = sbr.rel (0) target = $region25
    $region24: #{tpu_custom_call.1} parent=1 // pred_region
      %55 = dma.done [#allocation7], 192
    $region25: #{tpu_custom_call.1} parent=1 // pred_fallthru
      _
    // Predicated region
    $region26: #{tpu_custom_call.1} parent=1 // pred_check
      _
    $region27: #{tpu_custom_call.1} parent=1 // pred_check_branch
      %57 = sbr.rel (0) target = $region29
    $region28: #{tpu_custom_call.1} parent=1 // pred_region
      %58 = dma.done [#allocation7], 384
    $region29: #{tpu_custom_call.1} parent=1 // pred_fallthru
      _
    %v60 = vld [vmem:[#allocation6] sm:$0xf]
    %v61 = vld [vmem:[#allocation6 + $0x4] sm:$0xf]
    %v62 = vld [vmem:[#allocation6 + $0x8] sm:$0x3]
    %v63 = vld [vmem:[#allocation8] sm:$0xff]
    %v64 = vld [vmem:[#allocation8 + $0x8] sm:$0xff]
    %v65 = vld [vmem:[#allocation8 + $0x10] sm:$0xf]
    %v66 = vld [vmem:[%s3] sm:$0x1]
    %vm67 = vcmask 162816
    %68 = vst.msk [vmem:[#allocation2] sm:$0xff] %vm67, 0.0
    %v69 = vld [vmem:[#allocation3] sm:$0xff]
    %v70 = vld [vmem:[#allocation2] sm:$0xff]
    %v71 = vpack.c.bf16 %v70, %v70
    %v75 = vunpack.c.l.b16 %v60
    %v76 = vunpack.c.l.b16 %v61
    %v77 = vunpack.c.l.b16 %v62
    %v78 = vpack.c.b16 %v76, %v75
    %v79 = vpack.c.b16 %v77, %v77
    %v82 = vsel %vm67, %v71, 0
    %vm84 = vcmask 1041408
    %v86 = vsel %vm84, %v79, 0
    %88 = vmatprep.subr.bf16.mxu0 0
    %89 = vmatpush1.bf16.msra.mxu0 0
    %90 = vmatprep.subr.bf16.mxu0 0
    %91 = vmatpush1.bf16.msra.mxu0 0
    %92 = vmatprep.subr.bf16.mxu0 0
    %93 = vmatpush1.bf16.msra.mxu0 0
    %94 = vmatprep.subr.bf16.mxu0 0
    %95 = vmatpush1.bf16.msra.mxu0 0
    %96 = vmatprep.subr.bf16.mxu0 0
    %97 = vmatpush1.bf16.msra.mxu0 0
    %98 = vmatprep.subr.bf16.mxu0 0
    %99 = vmatpush1.bf16.msra.mxu0 0
    %100 = vmatprep.subr.bf16.mxu0 0
    %101 = vmatpush1.bf16.msra.mxu0 %v86
    %102 = vmatprep.subr.bf16.mxu0 0
    %103 = vmatpush1.bf16.msra.mxu0 %v78
    %104 = vmatprep.subr.bf16.mxu0 0
    %105 = vmatpush2.bf16.msra.mxu0 0
    %106 = vmatprep.subr.bf16.mxu0 0
    %107 = vmatpush2.bf16.msra.mxu0 0
    %108 = vmatprep.subr.bf16.mxu0 0
    %109 = vmatpush2.bf16.msra.mxu0 0
    %110 = vmatprep.subr.bf16.mxu0 0
    %111 = vmatpush2.bf16.msra.mxu0 0
    %112 = vmatprep.subr.bf16.mxu0 0
    %113 = vmatpush2.bf16.msra.mxu0 0
    %114 = vmatprep.subr.bf16.mxu0 0
    %115 = vmatpush2.bf16.msra.mxu0 0
    %116 = vmatprep.subr.bf16.mxu0 0
    %117 = vmatpush2.bf16.msra.mxu0 0
    %118 = vmatprep.subr.bf16.mxu0 0
    %119 = vmatpush2.bf16.msra.mxu0 0
    %120 = vmatprep.mubr.bf16.mxu0 0
    %121 = vmatmul.mubr.bf16.gmra.mxu0 %v82
    %v122 = vpop.f32.mrf.mxu0
    %v123 = vadd.f32 0.0, %v122
    %v124 = vpop.f32.mrf.mxu0
    %v125 = vpop.f32.mrf.mxu0
    %v126 = vpop.f32.mrf.mxu0
    %127 = vdwg.mxu0
    %v128 = vadd.f32 %v69, %v123
    %v129 = vmax.f32 %v128, 0.0
    %130 = vst.msk [vmem:[#allocation2] sm:$0xff] %vm67, %v129
    %s131 = scalar_lea.vmem [#allocation3], 8
    %v132 = vld [vmem:[%s131] sm:$0xff]
    %v133 = vld [vmem:[#allocation2] sm:$0xff]
    %v134 = vpack.c.bf16 %v133, %v133
    %v136 = vsel %vm67, %v134, 0
    %138 = vmatprep.subr.bf16.mxu0 0
    %139 = vmatpush1.bf16.msra.mxu0 0
    %140 = vmatprep.subr.bf16.mxu0 0
    %141 = vmatpush1.bf16.msra.mxu0 0
    %142 = vmatprep.subr.bf16.mxu0 0
    %143 = vmatpush1.bf16.msra.mxu0 0
    %144 = vmatprep.subr.bf16.mxu0 0
    %145 = vmatpush1.bf16.msra.mxu0 0
    %146 = vmatprep.subr.bf16.mxu0 0
    %147 = vmatpush1.bf16.msra.mxu0 0
    %148 = vmatprep.subr.bf16.mxu0 0
    %149 = vmatpush1.bf16.msra.mxu0 0
    %150 = vmatprep.subr.bf16.mxu0 0
    %151 = vmatpush1.bf16.msra.mxu0 %v86
    %152 = vmatprep.subr.bf16.mxu0 0
    %153 = vmatpush1.bf16.msra.mxu0 %v78
    %154 = vmatprep.subr.bf16.mxu0 0
    %155 = vmatpush2.bf16.msra.mxu0 0
    %156 = vmatprep.subr.bf16.mxu0 0
    %157 = vmatpush2.bf16.msra.mxu0 0
    %158 = vmatprep.subr.bf16.mxu0 0
    %159 = vmatpush2.bf16.msra.mxu0 0
    %160 = vmatprep.subr.bf16.mxu0 0
    %161 = vmatpush2.bf16.msra.mxu0 0
    %162 = vmatprep.subr.bf16.mxu0 0
    %163 = vmatpush2.bf16.msra.mxu0 0
    %164 = vmatprep.subr.bf16.mxu0 0
    %165 = vmatpush2.bf16.msra.mxu0 0
    %166 = vmatprep.subr.bf16.mxu0 0
    %167 = vmatpush2.bf16.msra.mxu0 0
    %168 = vmatprep.subr.bf16.mxu0 0
    %169 = vmatpush2.bf16.msra.mxu0 0
    %170 = vmatprep.mubr.bf16.mxu0 0
    %171 = vmatmul.mubr.bf16.gmra.mxu0 %v136
    %v172 = vpop.f32.mrf.mxu0
    %v173 = vadd.f32 0.0, %v172
    %v174 = vpop.f32.mrf.mxu0
    %v175 = vpop.f32.mrf.mxu0
    %v176 = vpop.f32.mrf.mxu0
    %177 = vdwg.mxu0
    %v178 = vadd.f32 %v132, %v173
    %v179 = vmax.f32 %v178, 0.0
    %180 = vst.msk [vmem:[#allocation2] sm:$0xff] %vm67, %v179
    %s181 = scalar_lea.vmem [#allocation3], 16
    %v182 = vld [vmem:[%s181] sm:$0xff]
    %v183 = vld [vmem:[#allocation2] sm:$0xff]
    %v184 = vpack.c.bf16 %v183, %v183
    %v186 = vsel %vm67, %v184, 0
    %188 = vmatprep.subr.bf16.mxu0 0
    %189 = vmatpush1.bf16.msra.mxu0 0
    %190 = vmatprep.subr.bf16.mxu0 0
    %191 = vmatpush1.bf16.msra.mxu0 0
    %192 = vmatprep.subr.bf16.mxu0 0
    %193 = vmatpush1.bf16.msra.mxu0 0
    %194 = vmatprep.subr.bf16.mxu0 0
    %195 = vmatpush1.bf16.msra.mxu0 0
    %196 = vmatprep.subr.bf16.mxu0 0
    %197 = vmatpush1.bf16.msra.mxu0 0
    %198 = vmatprep.subr.bf16.mxu0 0
    %199 = vmatpush1.bf16.msra.mxu0 0
    %200 = vmatprep.subr.bf16.mxu0 0
    %201 = vmatpush1.bf16.msra.mxu0 %v86
    %202 = vmatprep.subr.bf16.mxu0 0
    %203 = vmatpush1.bf16.msra.mxu0 %v78
    %204 = vmatprep.subr.bf16.mxu0 0
    %205 = vmatpush2.bf16.msra.mxu0 0
    %206 = vmatprep.subr.bf16.mxu0 0
    %207 = vmatpush2.bf16.msra.mxu0 0
    %208 = vmatprep.subr.bf16.mxu0 0
    %209 = vmatpush2.bf16.msra.mxu0 0
    %210 = vmatprep.subr.bf16.mxu0 0
    %211 = vmatpush2.bf16.msra.mxu0 0
    %212 = vmatprep.subr.bf16.mxu0 0
    %213 = vmatpush2.bf16.msra.mxu0 0
    %214 = vmatprep.subr.bf16.mxu0 0
    %215 = vmatpush2.bf16.msra.mxu0 0
    %216 = vmatprep.subr.bf16.mxu0 0
    %217 = vmatpush2.bf16.msra.mxu0 0
    %218 = vmatprep.subr.bf16.mxu0 0
    %219 = vmatpush2.bf16.msra.mxu0 0
    %220 = vmatprep.mubr.bf16.mxu0 0
    %221 = vmatmul.mubr.bf16.gmra.mxu0 %v186
    %v222 = vpop.f32.mrf.mxu0
    %v223 = vadd.f32 0.0, %v222
    %v224 = vpop.f32.mrf.mxu0
    %v225 = vpop.f32.mrf.mxu0
    %v226 = vpop.f32.mrf.mxu0
    %227 = vdwg.mxu0
    %v228 = vadd.f32 %v182, %v223
    %v229 = vmax.f32 %v228, 0.0
    %230 = vst.msk [vmem:[#allocation2] sm:$0xff] %vm67, %v229
    %s231 = scalar_lea.vmem [#allocation3], 24
    %v232 = vld [vmem:[%s231] sm:$0xff]
    %v233 = vld [vmem:[#allocation2] sm:$0xff]
    %v234 = vpack.c.bf16 %v233, %v233
    %v236 = vsel %vm67, %v234, 0
    %238 = vmatprep.subr.bf16.mxu0 0
    %239 = vmatpush1.bf16.msra.mxu0 0
    %240 = vmatprep.subr.bf16.mxu0 0
    %241 = vmatpush1.bf16.msra.mxu0 0
    %242 = vmatprep.subr.bf16.mxu0 0
    %243 = vmatpush1.bf16.msra.mxu0 0
    %244 = vmatprep.subr.bf16.mxu0 0
    %245 = vmatpush1.bf16.msra.mxu0 0
    %246 = vmatprep.subr.bf16.mxu0 0
    %247 = vmatpush1.bf16.msra.mxu0 0
    %248 = vmatprep.subr.bf16.mxu0 0
    %249 = vmatpush1.bf16.msra.mxu0 0
    %250 = vmatprep.subr.bf16.mxu0 0
    %251 = vmatpush1.bf16.msra.mxu0 %v86
    %252 = vmatprep.subr.bf16.mxu0 0
    %253 = vmatpush1.bf16.msra.mxu0 %v78
    %254 = vmatprep.subr.bf16.mxu0 0
    %255 = vmatpush2.bf16.msra.mxu0 0
    %256 = vmatprep.subr.bf16.mxu0 0
    %257 = vmatpush2.bf16.msra.mxu0 0
    %258 = vmatprep.subr.bf16.mxu0 0
    %259 = vmatpush2.bf16.msra.mxu0 0
    %260 = vmatprep.subr.bf16.mxu0 0
    %261 = vmatpush2.bf16.msra.mxu0 0
    %262 = vmatprep.subr.bf16.mxu0 0
    %263 = vmatpush2.bf16.msra.mxu0 0
    %264 = vmatprep.subr.bf16.mxu0 0
    %265 = vmatpush2.bf16.msra.mxu0 0
    %266 = vmatprep.subr.bf16.mxu0 0
    %267 = vmatpush2.bf16.msra.mxu0 0
    %268 = vmatprep.subr.bf16.mxu0 0
    %269 = vmatpush2.bf16.msra.mxu0 0
    %270 = vmatprep.mubr.bf16.mxu0 0
    %271 = vmatmul.mubr.bf16.gmra.mxu0 %v236
    %v272 = vpop.f32.mrf.mxu0
    %v273 = vadd.f32 0.0, %v272
    %v274 = vpop.f32.mrf.mxu0
    %v275 = vpop.f32.mrf.mxu0
    %v276 = vpop.f32.mrf.mxu0
    %277 = vdwg.mxu0
    %v278 = vadd.f32 %v232, %v273
    %v279 = vmax.f32 %v278, 0.0
    %280 = vst.msk [vmem:[#allocation2] sm:$0xff] %vm67, %v279
    %s281 = scalar_lea.vmem [#allocation3], 32
    %v282 = vld [vmem:[%s281] sm:$0xff]
    %v283 = vld [vmem:[#allocation2] sm:$0xff]
    %v284 = vpack.c.bf16 %v283, %v283
    %v286 = vsel %vm67, %v284, 0
    %288 = vmatprep.subr.bf16.mxu0 0
    %289 = vmatpush1.bf16.msra.mxu0 0
    %290 = vmatprep.subr.bf16.mxu0 0
    %291 = vmatpush1.bf16.msra.mxu0 0
    %292 = vmatprep.subr.bf16.mxu0 0
    %293 = vmatpush1.bf16.msra.mxu0 0
    %294 = vmatprep.subr.bf16.mxu0 0
    %295 = vmatpush1.bf16.msra.mxu0 0
    %296 = vmatprep.subr.bf16.mxu0 0
    %297 = vmatpush1.bf16.msra.mxu0 0
    %298 = vmatprep.subr.bf16.mxu0 0
    %299 = vmatpush1.bf16.msra.mxu0 0
    %300 = vmatprep.subr.bf16.mxu0 0
    %301 = vmatpush1.bf16.msra.mxu0 %v86
    %302 = vmatprep.subr.bf16.mxu0 0
    %303 = vmatpush1.bf16.msra.mxu0 %v78
    %304 = vmatprep.subr.bf16.mxu0 0
    %305 = vmatpush2.bf16.msra.mxu0 0
    %306 = vmatprep.subr.bf16.mxu0 0
    %307 = vmatpush2.bf16.msra.mxu0 0
    %308 = vmatprep.subr.bf16.mxu0 0
    %309 = vmatpush2.bf16.msra.mxu0 0
    %310 = vmatprep.subr.bf16.mxu0 0
    %311 = vmatpush2.bf16.msra.mxu0 0
    %312 = vmatprep.subr.bf16.mxu0 0
    %313 = vmatpush2.bf16.msra.mxu0 0
    %314 = vmatprep.subr.bf16.mxu0 0
    %315 = vmatpush2.bf16.msra.mxu0 0
    %316 = vmatprep.subr.bf16.mxu0 0
    %317 = vmatpush2.bf16.msra.mxu0 0
    %318 = vmatprep.subr.bf16.mxu0 0
    %319 = vmatpush2.bf16.msra.mxu0 0
    %320 = vmatprep.mubr.bf16.mxu0 0
    %321 = vmatmul.mubr.bf16.gmra.mxu0 %v286
    %v322 = vpop.f32.mrf.mxu0
    %v323 = vadd.f32 0.0, %v322
    %v324 = vpop.f32.mrf.mxu0
    %v325 = vpop.f32.mrf.mxu0
    %v326 = vpop.f32.mrf.mxu0
    %327 = vdwg.mxu0
    %v328 = vadd.f32 %v282, %v323
    %v329 = vmax.f32 %v328, 0.0
    %330 = vst.msk [vmem:[#allocation2] sm:$0xff] %vm67, %v329
    %s331 = scalar_lea.vmem [#allocation3], 40
    %v332 = vld [vmem:[%s331] sm:$0xff]
    %v333 = vld [vmem:[#allocation2] sm:$0xff]
    %v334 = vpack.c.bf16 %v333, %v333
    %v336 = vsel %vm67, %v334, 0
    %338 = vmatprep.subr.bf16.mxu0 0
    %339 = vmatpush1.bf16.msra.mxu0 0
    %340 = vmatprep.subr.bf16.mxu0 0
    %341 = vmatpush1.bf16.msra.mxu0 0
    %342 = vmatprep.subr.bf16.mxu0 0
    %343 = vmatpush1.bf16.msra.mxu0 0
    %344 = vmatprep.subr.bf16.mxu0 0
    %345 = vmatpush1.bf16.msra.mxu0 0
    %346 = vmatprep.subr.bf16.mxu0 0
    %347 = vmatpush1.bf16.msra.mxu0 0
    %348 = vmatprep.subr.bf16.mxu0 0
    %349 = vmatpush1.bf16.msra.mxu0 0
    %350 = vmatprep.subr.bf16.mxu0 0
    %351 = vmatpush1.bf16.msra.mxu0 %v86
    %352 = vmatprep.subr.bf16.mxu0 0
    %353 = vmatpush1.bf16.msra.mxu0 %v78
    %354 = vmatprep.subr.bf16.mxu0 0
    %355 = vmatpush2.bf16.msra.mxu0 0
    %356 = vmatprep.subr.bf16.mxu0 0
    %357 = vmatpush2.bf16.msra.mxu0 0
    %358 = vmatprep.subr.bf16.mxu0 0
    %359 = vmatpush2.bf16.msra.mxu0 0
    %360 = vmatprep.subr.bf16.mxu0 0
    %361 = vmatpush2.bf16.msra.mxu0 0
    %362 = vmatprep.subr.bf16.mxu0 0
    %363 = vmatpush2.bf16.msra.mxu0 0
    %364 = vmatprep.subr.bf16.mxu0 0
    %365 = vmatpush2.bf16.msra.mxu0 0
    %366 = vmatprep.subr.bf16.mxu0 0
    %367 = vmatpush2.bf16.msra.mxu0 0
    %368 = vmatprep.subr.bf16.mxu0 0
    %369 = vmatpush2.bf16.msra.mxu0 0
    %370 = vmatprep.mubr.bf16.mxu0 0
    %371 = vmatmul.mubr.bf16.gmra.mxu0 %v336
    %v372 = vpop.f32.mrf.mxu0
    %v373 = vadd.f32 0.0, %v372
    %v374 = vpop.f32.mrf.mxu0
    %v375 = vpop.f32.mrf.mxu0
    %v376 = vpop.f32.mrf.mxu0
    %377 = vdwg.mxu0
    %v378 = vadd.f32 %v332, %v373
    %v379 = vmax.f32 %v378, 0.0
    %380 = vst.msk [vmem:[#allocation2] sm:$0xff] %vm67, %v379
    %s381 = scalar_lea.vmem [#allocation3], 48
    %v382 = vld [vmem:[%s381] sm:$0xff]
    %v383 = vld [vmem:[#allocation2] sm:$0xff]
    %v384 = vpack.c.bf16 %v383, %v383
    %v386 = vsel %vm67, %v384, 0
    %388 = vmatprep.subr.bf16.mxu0 0
    %389 = vmatpush1.bf16.msra.mxu0 0
    %390 = vmatprep.subr.bf16.mxu0 0
    %391 = vmatpush1.bf16.msra.mxu0 0
    %392 = vmatprep.subr.bf16.mxu0 0
    %393 = vmatpush1.bf16.msra.mxu0 0
    %394 = vmatprep.subr.bf16.mxu0 0
    %395 = vmatpush1.bf16.msra.mxu0 0
    %396 = vmatprep.subr.bf16.mxu0 0
    %397 = vmatpush1.bf16.msra.mxu0 0
    %398 = vmatprep.subr.bf16.mxu0 0
    %399 = vmatpush1.bf16.msra.mxu0 0
    %400 = vmatprep.subr.bf16.mxu0 0
    %401 = vmatpush1.bf16.msra.mxu0 %v86
    %402 = vmatprep.subr.bf16.mxu0 0
    %403 = vmatpush1.bf16.msra.mxu0 %v78
    %404 = vmatprep.subr.bf16.mxu0 0
    %405 = vmatpush2.bf16.msra.mxu0 0
    %406 = vmatprep.subr.bf16.mxu0 0
    %407 = vmatpush2.bf16.msra.mxu0 0
    %408 = vmatprep.subr.bf16.mxu0 0
    %409 = vmatpush2.bf16.msra.mxu0 0
    %410 = vmatprep.subr.bf16.mxu0 0
    %411 = vmatpush2.bf16.msra.mxu0 0
    %412 = vmatprep.subr.bf16.mxu0 0
    %413 = vmatpush2.bf16.msra.mxu0 0
    %414 = vmatprep.subr.bf16.mxu0 0
    %415 = vmatpush2.bf16.msra.mxu0 0
    %416 = vmatprep.subr.bf16.mxu0 0
    %417 = vmatpush2.bf16.msra.mxu0 0
    %418 = vmatprep.subr.bf16.mxu0 0
    %419 = vmatpush2.bf16.msra.mxu0 0
    %420 = vmatprep.mubr.bf16.mxu0 0
    %421 = vmatmul.mubr.bf16.gmra.mxu0 %v386
    %v422 = vpop.f32.mrf.mxu0
    %v423 = vadd.f32 0.0, %v422
    %v424 = vpop.f32.mrf.mxu0
    %v425 = vpop.f32.mrf.mxu0
    %v426 = vpop.f32.mrf.mxu0
    %427 = vdwg.mxu0
    %v428 = vadd.f32 %v382, %v423
    %v429 = vmax.f32 %v428, 0.0
    %430 = vst.msk [vmem:[#allocation2] sm:$0xff] %vm67, %v429
    %s431 = scalar_lea.vmem [#allocation3], 56
    %v432 = vld [vmem:[%s431] sm:$0xff]
    %v433 = vld [vmem:[#allocation2] sm:$0xff]
    %v434 = vpack.c.bf16 %v433, %v433
    %v436 = vsel %vm67, %v434, 0
    %438 = vmatprep.subr.bf16.mxu0 0
    %439 = vmatpush1.bf16.msra.mxu0 0
    %440 = vmatprep.subr.bf16.mxu0 0
    %441 = vmatpush1.bf16.msra.mxu0 0
    %442 = vmatprep.subr.bf16.mxu0 0
    %443 = vmatpush1.bf16.msra.mxu0 0
    %444 = vmatprep.subr.bf16.mxu0 0
    %445 = vmatpush1.bf16.msra.mxu0 0
    %446 = vmatprep.subr.bf16.mxu0 0
    %447 = vmatpush1.bf16.msra.mxu0 0
    %448 = vmatprep.subr.bf16.mxu0 0
    %449 = vmatpush1.bf16.msra.mxu0 0
    %450 = vmatprep.subr.bf16.mxu0 0
    %451 = vmatpush1.bf16.msra.mxu0 %v86
    %452 = vmatprep.subr.bf16.mxu0 0
    %453 = vmatpush1.bf16.msra.mxu0 %v78
    %454 = vmatprep.subr.bf16.mxu0 0
    %455 = vmatpush2.bf16.msra.mxu0 0
    %456 = vmatprep.subr.bf16.mxu0 0
    %457 = vmatpush2.bf16.msra.mxu0 0
    %458 = vmatprep.subr.bf16.mxu0 0
    %459 = vmatpush2.bf16.msra.mxu0 0
    %460 = vmatprep.subr.bf16.mxu0 0
    %461 = vmatpush2.bf16.msra.mxu0 0
    %462 = vmatprep.subr.bf16.mxu0 0
    %463 = vmatpush2.bf16.msra.mxu0 0
    %464 = vmatprep.subr.bf16.mxu0 0
    %465 = vmatpush2.bf16.msra.mxu0 0
    %466 = vmatprep.subr.bf16.mxu0 0
    %467 = vmatpush2.bf16.msra.mxu0 0
    %468 = vmatprep.subr.bf16.mxu0 0
    %469 = vmatpush2.bf16.msra.mxu0 0
    %470 = vmatprep.mubr.bf16.mxu0 0
    %471 = vmatmul.mubr.bf16.gmra.mxu0 %v436
    %v472 = vpop.f32.mrf.mxu0
    %v473 = vadd.f32 0.0, %v472
    %v474 = vpop.f32.mrf.mxu0
    %v475 = vpop.f32.mrf.mxu0
    %v476 = vpop.f32.mrf.mxu0
    %477 = vdwg.mxu0
    %v478 = vadd.f32 %v432, %v473
    %v479 = vmax.f32 %v478, 0.0
    %480 = vst.msk [vmem:[#allocation2] sm:$0xff] %vm67, %v479
    %v481 = vld [vmem:[#allocation2] sm:$0xff]
    %v483 = vlaneseq
    %v484 = vshrl.u32 %v483, 7
    %v485 = vsub.s32 0, %v484
    %v486 = vrot.slane %v66, %v485
    %v489 = vsel %vm67, %v481, 0
    %vm491 = vcmask 1043456
    %v493 = vsel %vm491, %v65, 0
    %495 = vmatprep.subr.mxu0 0.0
    %496 = vmatpush1.msra.mxu0 0.0
    %497 = vmatprep.subr.mxu0 0.0
    %498 = vmatpush1.msra.mxu0 0.0
    %499 = vmatprep.subr.mxu0 0.0
    %500 = vmatpush1.msra.mxu0 0.0
    %501 = vmatprep.subr.mxu0 0.0
    %502 = vmatpush1.msra.mxu0 0.0
    %503 = vmatprep.subr.mxu0 0.0
    %504 = vmatpush1.msra.mxu0 0.0
    %505 = vmatprep.subr.mxu0 0.0
    %506 = vmatpush1.msra.mxu0 0.0
    %507 = vmatprep.subr.mxu0 0.0
    %508 = vmatpush1.msra.mxu0 0.0
    %509 = vmatprep.subr.mxu0 0.0
    %510 = vmatpush1.msra.mxu0 0.0
    %511 = vmatprep.subr.mxu0 0.0
    %512 = vmatpush1.msra.mxu0 0.0
    %513 = vmatprep.subr.mxu0 0.0
    %514 = vmatpush1.msra.mxu0 0.0
    %515 = vmatprep.subr.mxu0 0.0
    %516 = vmatpush1.msra.mxu0 0.0
    %517 = vmatprep.subr.mxu0 0.0
    %518 = vmatpush1.msra.mxu0 0.0
    %519 = vmatprep.subr.mxu0 0.0
    %520 = vmatpush1.msra.mxu0 0.0
    %521 = vmatprep.subr.mxu0 0.0
    %522 = vmatpush1.msra.mxu0 %v493
    %523 = vmatprep.subr.mxu0 0.0
    %524 = vmatpush1.msra.mxu0 %v64
    %525 = vmatprep.subr.mxu0 0.0
    %526 = vmatpush1.msra.mxu0 %v63
    %527 = vmatprep.subr.mxu0 0.0
    %528 = vmatpush2.msra.mxu0 0.0
    %529 = vmatprep.subr.mxu0 0.0
    %530 = vmatpush2.msra.mxu0 0.0
    %531 = vmatprep.subr.mxu0 0.0
    %532 = vmatpush2.msra.mxu0 0.0
    %533 = vmatprep.subr.mxu0 0.0
    %534 = vmatpush2.msra.mxu0 0.0
    %535 = vmatprep.subr.mxu0 0.0
    %536 = vmatpush2.msra.mxu0 0.0
    %537 = vmatprep.subr.mxu0 0.0
    %538 = vmatpush2.msra.mxu0 0.0
    %539 = vmatprep.subr.mxu0 0.0
    %540 = vmatpush2.msra.mxu0 0.0
    %541 = vmatprep.subr.mxu0 0.0
    %542 = vmatpush2.msra.mxu0 0.0
    %543 = vmatprep.subr.mxu0 0.0
    %544 = vmatpush2.msra.mxu0 0.0
    %545 = vmatprep.subr.mxu0 0.0
    %546 = vmatpush2.msra.mxu0 0.0
    %547 = vmatprep.subr.mxu0 0.0
    %548 = vmatpush2.msra.mxu0 0.0
    %549 = vmatprep.subr.mxu0 0.0
    %550 = vmatpush2.msra.mxu0 0.0
    %551 = vmatprep.subr.mxu0 0.0
    %552 = vmatpush2.msra.mxu0 0.0
    %553 = vmatprep.subr.mxu0 0.0
    %554 = vmatpush2.msra.mxu0 0.0
    %555 = vmatprep.subr.mxu0 0.0
    %556 = vmatpush2.msra.mxu0 0.0
    %557 = vmatprep.subr.mxu0 0.0
    %558 = vmatpush2.msra.mxu0 0.0
    %559 = vmatprep.mubr.f32.mxu0 0.0
    %560 = vmatmul.mubr.f32.gmra.mxu0 %v489
    %v561 = vpop.f32.mrf.mxu0
    %v562 = vadd.f32 %v486, %v561
    %v563 = vpop.f32.mrf.mxu0
    %564 = vdwg.mxu0
    %565 = vst [vmem:[#allocation9] sm:$0xff] %v562
    // Predicated region
    $region30: #{tpu_custom_call.1} parent=1 // pred_check
      _
    $region31: #{tpu_custom_call.1} parent=1 // pred_check_branch
      %567 = sbr.rel (0) target = $region33
    $region32: #{tpu_custom_call.1} parent=1 // pred_region
      %s569 = ssub.s32 128, 128
      %570 = vsyncadd [#allocation5], %s569
      %s572 = sshll.u32 [#allocation9], 4
      %s573 = int_to_ptr.vmem [resolvable:$true] %s572
      %575 = dma.vmem_to_hbm [thread:$0]  %s573, 128, %s4, [#allocation5]
    $region33: #{tpu_custom_call.1} parent=1 // pred_fallthru
      _
    // Predicated region
    $region34: #{tpu_custom_call.1} parent=1 // pred_check
      _
    $region35: #{tpu_custom_call.1} parent=1 // pred_check_branch
      %577 = sbr.rel (0) target = $region37
    $region36: #{tpu_custom_call.1} parent=1 // pred_region
      %578 = dma.done [#allocation5], 128
    $region37: #{tpu_custom_call.1} parent=1 // pred_fallthru
      _
    %579 = vsyncpa [#allocation4], 1
    %580 = vsyncpa [#allocation7], 1
    %581 = vsyncpa [#allocation5], 1

</llo_original>
